<compile_context>
chip_gen: v6e
topology: v6e:2x2x1
jax: 0.10.0
libtpu: 0.0.40
codegen_flags: <defaults>
</compile_context>

<pallas_src>
import jax
import jax.numpy as jnp
from jax.experimental import pallas as pl
from jax.experimental.pallas import tpu as pltpu

_BN_EPS = 1e-5


# ----------------------------- helpers ---------------------------------------
def _round_up(x, m):
    return (x + m - 1) // m * m


def _pad_to(x, rows, cols):
    pr = rows - x.shape[0]
    pc = cols - x.shape[1]
    if pr == 0 and pc == 0:
        return x
    return jnp.pad(x, ((0, pr), (0, pc)))


def _gcn_norm_dense(edge_index, edge_weight, num_nodes):
    """Dense Â = D^{-1/2}(A + I)D^{-1/2}; degree over the source (row) index,
    matching GCNConv(flow='target_to_source')."""
    row, col = edge_index[0], edge_index[1]
    if edge_weight is None:
        edge_weight = jnp.ones(row.shape[0], jnp.float32)
    a = jnp.zeros((num_nodes, num_nodes), jnp.float32).at[row, col].add(edge_weight)
    a = a + jnp.eye(num_nodes, dtype=jnp.float32)      # add self loops (weight 1.0)
    deg = jnp.sum(a, axis=1)
    d_inv_sqrt = jnp.where(deg > 0.0, jax.lax.rsqrt(deg), 0.0)
    return d_inv_sqrt[:, None] * a * d_inv_sqrt[None, :]


# ----------------------------- kernels ----------------------------------------
def _make_linear_kernel(*, add_bias, apply_relu, apply_res):
    """out = (X @ W [+ b]) [relu] [+ residual]   (row-tiled, single matmul)."""
    def kernel(*refs):
        refs = list(refs)
        x_ref = refs.pop(0)
        w_ref = refs.pop(0)
        b_ref = refs.pop(0) if add_bias else None
        r_ref = refs.pop(0) if apply_res else None
        o_ref = refs.pop(0)

        h = jnp.dot(x_ref[...], w_ref[...], preferred_element_type=jnp.float32)
        if add_bias:
            h = h + b_ref[...]
        if apply_relu:
            h = jnp.maximum(h, 0.0)
        if apply_res:
            h = h + r_ref[...]
        o_ref[...] = h.astype(o_ref.dtype)
    return kernel


def _make_agg_kernel(*, apply_relu, apply_res):
    """H[i,:] = sum_k Â[i,k] @ XW[k,:] + b, accumulated in f32 VMEM scratch."""
    def kernel(*refs):
        refs = list(refs)
        a_ref = refs.pop(0)
        xw_ref = refs.pop(0)
        b_ref = refs.pop(0)
        r_ref = refs.pop(0) if apply_res else None
        o_ref = refs.pop(0)
        acc_ref = refs.pop(0)

        k = pl.program_id(1)

        @pl.when(k == 0)
        def _init():
            acc_ref[...] = jnp.zeros_like(acc_ref)

        acc_ref[...] += jnp.dot(a_ref[...], xw_ref[...],
                                preferred_element_type=jnp.float32)

        @pl.when(k == pl.num_programs(1) - 1)
        def _finalize():
            h = acc_ref[...] + b_ref[...]
            if apply_relu:
                h = jnp.maximum(h, 0.0)
            if apply_res:
                h = h + r_ref[...]
            o_ref[...] = h.astype(o_ref.dtype)
    return kernel


def _make_stats_kernel(*, n_valid, tile_rows):
    """Cross-tile sum / sum-of-squares over the node axis (rows >= n_valid masked)."""
    def kernel(h_ref, sum_ref, sq_ref):
        i = pl.program_id(0)

        @pl.when(i == 0)
        def _init():
            sum_ref[...] = jnp.zeros_like(sum_ref)
            sq_ref[...] = jnp.zeros_like(sq_ref)

        h = h_ref[...]
        row = jax.lax.broadcasted_iota(jnp.int32, h.shape, 0) + i * tile_rows
        h = jnp.where(row < n_valid, h, 0.0)
        sum_ref[...] += jnp.sum(h, axis=0, keepdims=True)
        sq_ref[...] += jnp.sum(h * h, axis=0, keepdims=True)
    return kernel


def _make_bn_epilogue_kernel(*, n_valid, apply_res, eps):
    """(h - mean) * rsqrt(var + eps) * gamma + beta -> ReLU -> (+ residual)."""
    inv_n = 1.0 / float(n_valid)

    def kernel(*refs):
        refs = list(refs)
        h_ref = refs.pop(0)
        sum_ref = refs.pop(0)
        sq_ref = refs.pop(0)
        g_ref = refs.pop(0)
        bt_ref = refs.pop(0)
        r_ref = refs.pop(0) if apply_res else None
        o_ref = refs.pop(0)

        mean = sum_ref[...] * inv_n
        var = jnp.maximum(sq_ref[...] * inv_n - mean * mean, 0.0)
        inv_std = jax.lax.rsqrt(var + eps)
        h = (h_ref[...] - mean) * inv_std * g_ref[...] + bt_ref[...]
        h = jnp.maximum(h, 0.0)
        if apply_res:
            h = h + r_ref[...]
        o_ref[...] = h.astype(o_ref.dtype)
    return kernel


# ------------------------------- wrapper --------------------------------------
def base_conv_heterogene(input_x, input_e=None, weight=None, *, params,
                         net_type='gcn', withbn=False, res=False,
                         matmul_dtype=jnp.bfloat16, row_tile=512):
    x = input_x.astype(jnp.float32)
    n, din = x.shape
    w = params['W'].astype(jnp.float32)
    dout = w.shape[1]
    if res:
        assert din == dout, "residual path requires input_dim == output_dim"

    # Tile plan: T rows / T contraction; D_out padded to lane-dense 128 multiple.
    t = row_tile if n >= row_tile else _round_up(n, 8)
    n_pad = _round_up(n, t)
    d_pad = _round_up(dout, 128)
    n_row_blocks = n_pad // t

    x_pad = _pad_to(x, n_pad, din)
    w_pad = _pad_to(w, din, d_pad)
    b_pad = _pad_to(params['b'].astype(jnp.float32).reshape(1, dout), 1, d_pad)
    gamma_pad = _pad_to(params['gamma'].astype(jnp.float32).reshape(1, dout), 1, d_pad)
    beta_pad = _pad_to(params['beta'].astype(jnp.float32).reshape(1, dout), 1, d_pad)
    x_res_pad = _pad_to(x, n_pad, d_pad) if res else None

    def cparams(sem):
        return pltpu.CompilerParams(dimension_semantics=sem,
                                    vmem_limit_bytes=32 * 1024 * 1024)

    fuse_epilogue = not withbn

    if net_type == 'gcn':
        # ---- stage 1: XW = X @ W (computed once; bias is added after propagate)
        xw = pl.pallas_call(
            _make_linear_kernel(add_bias=False, apply_relu=False, apply_res=False),
            out_shape=jax.ShapeDtypeStruct((n_pad, d_pad), matmul_dtype),
            grid=(n_row_blocks,),
            in_specs=[pl.BlockSpec((t, din), lambda i: (i, 0)),
                      pl.BlockSpec((din, d_pad), lambda i: (0, 0))],
            out_specs=pl.BlockSpec((t, d_pad), lambda i: (i, 0)),
            compiler_params=cparams(("parallel",)),
        )(x_pad.astype(matmul_dtype), w_pad.astype(matmul_dtype))

        # ---- stage 2: H = Â @ XW + b  (rows parallel, contraction arbitrary)
        a_norm = _gcn_norm_dense(input_e, weight, n)
        a_pad = _pad_to(a_norm, n_pad, n_pad).astype(matmul_dtype)

        in_specs = [pl.BlockSpec((t, t), lambda i, k: (i, k)),
                    pl.BlockSpec((t, d_pad), lambda i, k: (k, 0)),
                    pl.BlockSpec((1, d_pad), lambda i, k: (0, 0))]
        args = [a_pad, xw, b_pad]
        if fuse_epilogue and res:
            in_specs.append(pl.BlockSpec((t, d_pad), lambda i, k: (i, 0)))
            args.append(x_res_pad)

        bytes_accessed = (a_pad.size * a_pad.dtype.itemsize
                          + xw.size * xw.dtype.itemsize
                          + n_pad * d_pad * 4)
        h = pl.pallas_call(
            _make_agg_kernel(apply_relu=fuse_epilogue,
                             apply_res=fuse_epilogue and res),
            out_shape=jax.ShapeDtypeStruct((n_pad, d_pad), jnp.float32),
            grid=(n_row_blocks, n_pad // t),
            in_specs=in_specs,
            out_specs=pl.BlockSpec((t, d_pad), lambda i, k: (i, 0)),
            scratch_shapes=[pltpu.VMEM((t, d_pad), jnp.float32)],
            compiler_params=cparams(("parallel", "arbitrary")),
            cost_estimate=pl.CostEstimate(flops=2 * n_pad * n_pad * d_pad,
                                          transcendentals=0,
                                          bytes_accessed=bytes_accessed),
        )(*args)
    else:
        # ---- nn.Linear path: no (N, N) placeholder is ever built or DMA'd.
        in_specs = [pl.BlockSpec((t, din), lambda i: (i, 0)),
                    pl.BlockSpec((din, d_pad), lambda i: (0, 0)),
                    pl.BlockSpec((1, d_pad), lambda i: (0, 0))]
        args = [x_pad.astype(matmul_dtype), w_pad.astype(matmul_dtype), b_pad]
        if fuse_epilogue and res:
            in_specs.append(pl.BlockSpec((t, d_pad), lambda i: (i, 0)))
            args.append(x_res_pad)
        h = pl.pallas_call(
            _make_linear_kernel(add_bias=True,
                                apply_relu=fuse_epilogue,
                                apply_res=fuse_epilogue and res),
            out_shape=jax.ShapeDtypeStruct((n_pad, d_pad), jnp.float32),
            grid=(n_row_blocks,),
            in_specs=in_specs,
            out_specs=pl.BlockSpec((t, d_pad), lambda i: (i, 0)),
            compiler_params=cparams(("parallel",)),
        )(*args)

    if withbn:
        # ---- stage 3: global (cross-tile) batch statistics over the node axis.
        sums, sqs = pl.pallas_call(
            _make_stats_kernel(n_valid=n, tile_rows=t),
            out_shape=(jax.ShapeDtypeStruct((1, d_pad), jnp.float32),
                       jax.ShapeDtypeStruct((1, d_pad), jnp.float32)),
            grid=(n_row_blocks,),
            in_specs=[pl.BlockSpec((t, d_pad), lambda i: (i, 0))],
            out_specs=(pl.BlockSpec((1, d_pad), lambda i: (0, 0)),
                       pl.BlockSpec((1, d_pad), lambda i: (0, 0))),
            compiler_params=cparams(("arbitrary",)),
        )(h)

        # ---- stage 4: BN + ReLU (+ residual) epilogue, row-tiled.
        in_specs = [pl.BlockSpec((t, d_pad), lambda i: (i, 0)),
                    pl.BlockSpec((1, d_pad), lambda i: (0, 0)),
                    pl.BlockSpec((1, d_pad), lambda i: (0, 0)),
                    pl.BlockSpec((1, d_pad), lambda i: (0, 0)),
                    pl.BlockSpec((1, d_pad), lambda i: (0, 0))]
        args = [h, sums, sqs, gamma_pad, beta_pad]
        if res:
            in_specs.append(pl.BlockSpec((t, d_pad), lambda i: (i, 0)))
            args.append(x_res_pad)
        h = pl.pallas_call(
            _make_bn_epilogue_kernel(n_valid=n, apply_res=res, eps=_BN_EPS),
            out_shape=jax.ShapeDtypeStruct((n_pad, d_pad), jnp.float32),
            grid=(n_row_blocks,),
            in_specs=in_specs,
            out_specs=pl.BlockSpec((t, d_pad), lambda i: (i, 0)),
            compiler_params=cparams(("parallel",)),
        )(*args)

    return h[:n, :dout]


# --------------------------------- demo ---------------------------------------
if __name__ == "__main__":
    key = jax.random.PRNGKey(0)
    k_x, k_w = jax.random.split(key)

    N, DIN, DOUT = 16, 8, 8
    x = jax.random.normal(k_x, (N, DIN), dtype=jnp.float32)

    # Undirected ring graph -> edge_index [2, 2N].
    src = jnp.arange(N, dtype=jnp.int32)
    dst = (src + 1) % N
    edge_index = jnp.stack([jnp.concatenate([src, dst]),
                            jnp.concatenate([dst, src])], axis=0)

    params = {
        'W': jax.random.normal(k_w, (DIN, DOUT), dtype=jnp.float32) * 0.1,
        'b': jnp.full((DOUT,), 0.05, jnp.float32),
        'gamma': jnp.full((DOUT,), 1.5, jnp.float32),
        'beta': jnp.full((DOUT,), 0.1, jnp.float32),
    }

    a_dense = _gcn_norm_dense(edge_index, None, N)

    def reference(net_type, withbn, res):
        bf = jnp.bfloat16
        xw = jnp.dot(x.astype(bf), params['W'].astype(bf),
                     preferred_element_type=jnp.float32)
        if net_type == 'gcn':
            h = jnp.dot(a_dense.astype(bf), xw.astype(bf),
                        preferred_element_type=jnp.float32) + params['b'][None, :]
        else:
            h = xw + params['b'][None, :]
        if withbn:
            mean = jnp.mean(h, axis=0, keepdims=True)
            var = jnp.mean((h - mean) ** 2, axis=0, keepdims=True)
            h = (h - mean) * jax.lax.rsqrt(var + _BN_EPS)
            h = h * params['gamma'][None, :] + params['beta'][None, :]
        out = jnp.maximum(h, 0.0)
        if res:
            out = out + x
        return out

    configs = [
        ('gcn', False, False),      # default module config
        ('gcn', True, True),
        ('linear', True, False),
        ('linear', False, True),
    ]
    for net_type, withbn, res in configs:
        out = base_conv_heterogene(x, edge_index, None, params=params,
                                   net_type=net_type, withbn=withbn, res=res)
        out = jax.block_until_ready(out)
        ref = reference(net_type, withbn, res)
        assert out.shape == (N, DOUT)
        assert bool(jnp.allclose(out, ref, atol=5e-3, rtol=5e-3)), (
            f"mismatch for config {(net_type, withbn, res)}")

    print("KERNEL_OK")
</pallas_src>

<mosaic_0001>
module attributes {stable_mosaic.version = 11 : i64} {
  func.func @kernel(%arg0: i32, %arg1: memref<16x8xbf16, #tpu.memory_space<vmem>>, %arg2: memref<8x128xbf16, #tpu.memory_space<vmem>>, %arg3: memref<16x128xbf16, #tpu.memory_space<vmem>>) attributes {dimension_semantics = [#tpu.dimension_semantics<parallel>], iteration_bounds = array<i64: 1>, scalar_prefetch = 0 : i64, scratch_operands = 0 : i64, tpu.core_type = #tpu.core_type<tc>, window_params = [{transform_indices = @transform_0, window_bounds = array<i64: 16, 8>}, {pipeline_mode = #tpu.pipeline_mode<synchronous>, transform_indices = @transform_1, window_bounds = array<i64: 8, 128>}, {transform_indices = @transform_2, window_bounds = array<i64: 16, 128>}]} {
    %c0 = arith.constant 0 : index
    %c0_0 = arith.constant 0 : index
    %0 = vector.load %arg1[%c0, %c0_0] : memref<16x8xbf16, #tpu.memory_space<vmem>>, vector<16x8xbf16>
    %c0_1 = arith.constant 0 : index
    %c0_2 = arith.constant 0 : index
    %1 = vector.load %arg2[%c0_1, %c0_2] : memref<8x128xbf16, #tpu.memory_space<vmem>>, vector<8x128xbf16>
    %cst = arith.constant dense<0.000000e+00> : vector<16x128xf32>
    %2 = tpu.matmul %0, %1, %cst {dimension_numbers = #tpu.dot_dimension_numbers<[1], [0], [0], [1], [0, 0, 1, 1], [], []>} : vector<16x8xbf16>, vector<8x128xbf16>, vector<16x128xf32> -> vector<16x128xf32>
    %3 = arith.truncf %2 : vector<16x128xf32> to vector<16x128xbf16>
    %c0_3 = arith.constant 0 : index
    %c0_4 = arith.constant 0 : index
    %4 = vector.load %arg3[%c0_3, %c0_4] : memref<16x128xbf16, #tpu.memory_space<vmem>>, vector<16x128xbf16>
    tpu.vector_store %arg3[%c0_3, %c0_4], %3 {strides = array<i32>} : memref<16x128xbf16, #tpu.memory_space<vmem>>, vector<16x128xbf16>,
    return
  }
  func.func @transform_0(%arg0: i32) -> (i32, i32) {
    %c0_i32 = arith.constant 0 : i32
    %c0_i32_0 = arith.constant 0 : i32
    return %arg0, %c0_i32 : i32, i32
  }
  func.func @transform_1(%arg0: i32) -> (i32, i32) {
    %c0_i32 = arith.constant 0 : i32
    %c0_i32_0 = arith.constant 0 : i32
    %c0_i32_1 = arith.constant 0 : i32
    return %c0_i32, %c0_i32_0 : i32, i32
  }
  func.func @transform_2(%arg0: i32) -> (i32, i32) {
    %c0_i32 = arith.constant 0 : i32
    %c0_i32_0 = arith.constant 0 : i32
    return %arg0, %c0_i32 : i32, i32
  }
}

</mosaic_0001>

<llo_original>
// kernel: tpu_custom_call.1
$region0: #{tpu_custom_call.1}
  #allocation0 [shape = 'u32[]', space=smem, size = 0x4, offset = 0x4, fixed_abs, tag = 'smem constant byte address 0x4 - core index']
  #allocation1 [shape = 'u32[144,128]{1,0:T(1,128)}', space=vmem, size = 0x12000, scoped, tag = 'internal scratch']
  %s0 = inlined_call_operand.vmem [shape: bf16[16,8], index: 0, kind: input, shape index: {}]
  %s1 = inlined_call_operand.vmem [shape: bf16[8,128], index: 1, kind: input, shape index: {}]
  %s2 = inlined_call_operand.hbm [shape: bf16[16,128], index: 2, kind: output, shape index: {}]
  %s3 = sld [smem:[#allocation0]]
  $region18: #{tpu_custom_call.1} parent=0
    _
  %s5 = ssub.s32 1, %s3
  %s6 = scalar_select 0, %s5, %s3
  $region1: #{tpu_custom_call.1} parent=0
    #allocation2 [shape = 'u8[4096]{0}', space=vmem, size = 0x1000, scoped, tag = 'output window, operand 0, single buffered']
    #allocation3 [shape = 's32[1]{0}', space=sflag, size = 0x4, scoped, tag = 'scoped memory for tpu_custom_call.1']
    %7 = vsyncpa [#allocation3], 0
    // Predicated region
    $region2: #{tpu_custom_call.1} parent=1 // pred_check
      _
    $region3: #{tpu_custom_call.1} parent=1 // pred_check_branch
      %9 = sbr.rel (0) target = $region5
    $region4: #{tpu_custom_call.1} parent=1 // pred_region
      _
    $region5: #{tpu_custom_call.1} parent=1 // pred_fallthru
      _
    // Predicated region
    $region6: #{tpu_custom_call.1} parent=1 // pred_check
      _
    $region7: #{tpu_custom_call.1} parent=1 // pred_check_branch
      %11 = sbr.rel (0) target = $region9
    $region8: #{tpu_custom_call.1} parent=1 // pred_region
      _
    $region9: #{tpu_custom_call.1} parent=1 // pred_fallthru
      _
    %v13 = vld [vmem:[%s0] sm:$0xf]
    %v14 = vld [vmem:[%s0 + $0x4] sm:$0xf]
    %v15 = vld [vmem:[%s1] sm:$0xf]
    %v18 = vunpack.c.l.b16 %v13
    %v19 = vunpack.c.l.b16 %v14
    %v20 = vpack.c.b16 %v19, %v18
    %vm21 = vcmask 64512
    %v23 = vsel %vm21, %v20, 0
    %vm25 = vcmask 1043456
    %v27 = vsel %vm25, %v15, 0
    %29 = vmatprep.subr.bf16.mxu0 0
    %30 = vmatpush1.bf16.msra.mxu0 0
    %31 = vmatprep.subr.bf16.mxu0 0
    %32 = vmatpush1.bf16.msra.mxu0 0
    %33 = vmatprep.subr.bf16.mxu0 0
    %34 = vmatpush1.bf16.msra.mxu0 0
    %35 = vmatprep.subr.bf16.mxu0 0
    %36 = vmatpush1.bf16.msra.mxu0 0
    %37 = vmatprep.subr.bf16.mxu0 0
    %38 = vmatpush1.bf16.msra.mxu0 0
    %39 = vmatprep.subr.bf16.mxu0 0
    %40 = vmatpush1.bf16.msra.mxu0 0
    %41 = vmatprep.subr.bf16.mxu0 0
    %42 = vmatpush1.bf16.msra.mxu0 0
    %43 = vmatprep.subr.bf16.mxu0 0
    %44 = vmatpush1.bf16.msra.mxu0 %v27
    %45 = vmatprep.subr.bf16.mxu0 0
    %46 = vmatpush2.bf16.msra.mxu0 0
    %47 = vmatprep.subr.bf16.mxu0 0
    %48 = vmatpush2.bf16.msra.mxu0 0
    %49 = vmatprep.subr.bf16.mxu0 0
    %50 = vmatpush2.bf16.msra.mxu0 0
    %51 = vmatprep.subr.bf16.mxu0 0
    %52 = vmatpush2.bf16.msra.mxu0 0
    %53 = vmatprep.subr.bf16.mxu0 0
    %54 = vmatpush2.bf16.msra.mxu0 0
    %55 = vmatprep.subr.bf16.mxu0 0
    %56 = vmatpush2.bf16.msra.mxu0 0
    %57 = vmatprep.subr.bf16.mxu0 0
    %58 = vmatpush2.bf16.msra.mxu0 0
    %59 = vmatprep.subr.bf16.mxu0 0
    %60 = vmatpush2.bf16.msra.mxu0 0
    %61 = vmatprep.mubr.bf16.mxu0 0
    %62 = vmatmul.mubr.bf16.gmra.mxu0 %v23
    %v63 = vpop.f32.mrf.mxu0
    %v64 = vadd.f32 0.0, %v63
    %v65 = vpop.f32.mrf.mxu0
    %v66 = vpop.f32.mrf.mxu0
    %v67 = vadd.f32 0.0, %v66
    %v68 = vpop.f32.mrf.mxu0
    %69 = vdwg.mxu0
    %v70 = vpack.c.bf16 %v67, %v64
    %v72 = vunpack.c.l.b16 %v70
    %v73 = vunpack.c.h.b16 %v70
    %v74 = vpack.c.b16 %v72, %v72
    %v75 = vpack.c.b16 %v73, %v73
    %78 = vst [vmem:[#allocation2] sm:$0xf] %v74
    %79 = vst [vmem:[#allocation2 + $0x4] sm:$0xf] %v75
    // Predicated region
    $region10: #{tpu_custom_call.1} parent=1 // pred_check
      _
    $region11: #{tpu_custom_call.1} parent=1 // pred_check_branch
      %81 = sbr.rel (0) target = $region13
    $region12: #{tpu_custom_call.1} parent=1 // pred_region
      %s83 = ssub.s32 128, 128
      %84 = vsyncadd [#allocation3], %s83
      %s85 = sshll.u32 [#allocation2], 4
      %s86 = int_to_ptr.vmem [resolvable:$true] %s85
      %91 = dma.vmem_to_hbm [thread:$0]  %s86, 128, %s2, [#allocation3], 64, 64, 4
    $region13: #{tpu_custom_call.1} parent=1 // pred_fallthru
      _
    // Predicated region
    $region14: #{tpu_custom_call.1} parent=1 // pred_check
      _
    $region15: #{tpu_custom_call.1} parent=1 // pred_check_branch
      %93 = sbr.rel (0) target = $region17
    $region16: #{tpu_custom_call.1} parent=1 // pred_region
      %94 = dma.done [#allocation3], 128
    $region17: #{tpu_custom_call.1} parent=1 // pred_fallthru
      _
    %95 = vsyncpa [#allocation3], 1

</llo_original>
